<compile_context>
chip_gen: v7x
topology: tpu7x:2x2x1
jax: 0.10.0
libtpu: 0.0.40
codegen_flags: <defaults>
</compile_context>

<pallas_src>
import functools
import math

import jax
import jax.numpy as jnp
from jax import lax
from jax.experimental import pallas as pl
from jax.experimental.pallas import tpu as pltpu

T_DIM = 3             # pred[:, :3] translation, pred[:, 3:] rotation
LANES = 128
MAX_TILE_ROWS = 6144  # rows of the (rows, 128) view per grid step:
                      # 6144 * 128 * 4 B = 3 MiB per f32 input block
SUBLANE_QUANTUM = 16  # row-chunk alignment safe for both f32 and bf16 refs


def _cdiv(a, b):
    return (a + b - 1) // b


def _round_up(x, m):
    return _cdiv(x, m) * m


def _period_rows(feat_dim):
    """Smallest row count P (multiple of SUBLANE_QUANTUM) with P*LANES % feat_dim == 0.

    With tile_rows a multiple of P, every accumulator position (r, c) then maps
    to a fixed feature column (flat_index mod feat_dim), independent of the
    grid step and of the row group inside a block.
    """
    d_red = feat_dim // math.gcd(feat_dim, LANES)
    return (d_red * SUBLANE_QUANTUM) // math.gcd(d_red, SUBLANE_QUANTUM)


def _atloc_kernel(sax_ref, saq_ref, pred_ref, targ_ref, out_ref, acc_ref, *,
                  batch, feat_dim, t_dim, tile_rows, period, tail_rows):
    """Grid axis 0 walks (tile_rows, 128) blocks of the flat lane-dense view."""
    i = pl.program_id(0)
    nsteps = pl.num_programs(0)

    @pl.when(i == 0)
    def _init():
        acc_ref[...] = jnp.zeros_like(acc_ref)

    groups = tile_rows // period

    def block_partial(valid_rows):
        # Fold this block into a single (period, 128) partial that lives in
        # vregs: 2 vector loads per data vreg, pure VPU (upcast/sub/abs/add),
        # no large read-modify-write accumulator and no cross-lane reduce.
        def body(k, carry):
            start = pl.multiple_of(k * period, period)
            p = pred_ref[pl.ds(start, period), :].astype(jnp.float32)
            t = targ_ref[pl.ds(start, period), :].astype(jnp.float32)
            d = jnp.abs(p - t)
            if valid_rows is not None:
                # Ragged last block: rows >= valid_rows were never DMA'd
                # (garbage in VMEM) -> zero them out.
                r = lax.broadcasted_iota(jnp.int32, (period, LANES), 0)
                d = jnp.where(start + r < valid_rows, d, 0.0)
            return carry + d

        return lax.fori_loop(0, groups, body,
                             jnp.zeros((period, LANES), jnp.float32),
                             unroll=min(4, groups))

    if tail_rows == 0:                       # static: grid divides evenly
        acc_ref[...] += block_partial(None)
    else:
        @pl.when(i < nsteps - 1)
        def _full():
            acc_ref[...] += block_partial(None)

        @pl.when(i == nsteps - 1)
        def _tail():
            acc_ref[...] += block_partial(tail_rows)

    @pl.when(i == nsteps - 1)
    def _epilogue():
        acc = acc_ref[...]                                  # (period, 128) f32
        r = lax.broadcasted_iota(jnp.int32, acc.shape, 0)
        c = lax.broadcasted_iota(jnp.int32, acc.shape, 1)
        # feature column = flat index mod feat_dim; exact float remainder
        # (positions < period*128 << 2**24) avoids vector integer division.
        pos = (r * LANES + c).astype(jnp.float32)
        fd = jnp.float32(feat_dim)
        col = pos - fd * jnp.floor(pos / fd)
        is_t = col < jnp.float32(t_dim)

        # Independent (exact) masked reduces for translation and rotation.
        t_sum = jnp.sum(jnp.where(is_t, acc, 0.0))
        q_sum = jnp.sum(jnp.where(is_t, 0.0, acc))

        # L1Loss(reduction='mean') over each slice, true (unpadded) batch.
        t_loss = t_sum / jnp.float32(batch * t_dim)
        q_loss = q_sum / jnp.float32(batch * (feat_dim - t_dim))

        sax = sax_ref[...]                                  # (1, 1)
        saq = saq_ref[...]                                  # (1, 1)
        out_ref[...] = (jnp.exp(-sax) * t_loss + sax
                        + jnp.exp(-saq) * q_loss + saq)     # (1, 1)


def atloc_criterion(pred, targ, sax, saq, *, max_tile_rows=MAX_TILE_ROWS):
    """pred, targ: [B, D] float arrays (f32 or bf16); sax, saq: scalars."""
    assert pred.ndim == 2 and pred.shape == targ.shape
    B, D = pred.shape
    assert D > T_DIM
    N = B * D

    sax2 = jnp.asarray(sax, jnp.float32).reshape(1, 1)
    saq2 = jnp.asarray(saq, jnp.float32).reshape(1, 1)

    period = _period_rows(D)                    # 48 for D = 6
    n_rows = _cdiv(N, LANES)                    # rows of the flat view

    tile_rows = min(_round_up(max_tile_rows, period), _round_up(n_rows, period))
    if n_rows <= tile_rows:
        padded_rows = tile_rows                 # single full block (cheap pad)
    else:
        padded_rows = n_rows                    # ragged last block, masked
    padded_len = padded_rows * LANES
    num_blocks = _cdiv(padded_rows, tile_rows)
    tail_rows = padded_rows % tile_rows         # valid rows in the last block

    def flat_view(x):
        # [B, D] -> [B*D] -> (rows, 128): free bitcasts when B*D % 128 == 0;
        # otherwise one pad of the tail (single copy, no transpose).
        flat = x.reshape(-1)
        if padded_len != N:
            flat = jnp.pad(flat, (0, padded_len - N))   # zeros -> |0-0| = 0
        return flat.reshape(padded_rows, LANES)

    pred_v = flat_view(pred)
    targ_v = flat_view(targ)

    kernel = functools.partial(
        _atloc_kernel, batch=B, feat_dim=D, t_dim=T_DIM,
        tile_rows=tile_rows, period=period, tail_rows=tail_rows)

    out = pl.pallas_call(
        kernel,
        out_shape=jax.ShapeDtypeStruct((1, 1), jnp.float32),
        grid=(num_blocks,),
        in_specs=[
            pl.BlockSpec((1, 1), lambda i: (0, 0)),              # sax (once)
            pl.BlockSpec((1, 1), lambda i: (0, 0)),              # saq (once)
            pl.BlockSpec((tile_rows, LANES), lambda i: (i, 0)),  # pred view
            pl.BlockSpec((tile_rows, LANES), lambda i: (i, 0)),  # targ view
        ],
        out_specs=pl.BlockSpec((1, 1), lambda i: (0, 0)),        # resident out
        scratch_shapes=[pltpu.VMEM((period, LANES), jnp.float32)],
        compiler_params=pltpu.CompilerParams(
            dimension_semantics=("arbitrary",)),                 # reduction axis
    )(sax2, saq2, pred_v, targ_v)
    return out[0, 0]


def atloc_criterion_ref(pred, targ, sax, saq):
    """Pure-JAX reference mirroring the PyTorch forward exactly."""
    pred = pred.astype(jnp.float32)
    targ = targ.astype(jnp.float32)
    t_loss = jnp.mean(jnp.abs(pred[:, :T_DIM] - targ[:, :T_DIM]))
    q_loss = jnp.mean(jnp.abs(pred[:, T_DIM:] - targ[:, T_DIM:]))
    return jnp.exp(-sax) * t_loss + sax + jnp.exp(-saq) * q_loss + saq


if __name__ == "__main__":
    key = jax.random.PRNGKey(0)
    D = 6
    sax = jnp.float32(0.0)     # matches nn.Parameter(torch.Tensor([0.0]))
    saq = jnp.float32(0.0)

    # --- Test 1: AtLoc-sized small batch, f32, single block. ---
    kp, kt, key = jax.random.split(key, 3)
    pred = jax.random.normal(kp, (8, D), dtype=jnp.float32)
    targ = jax.random.normal(kt, (8, D), dtype=jnp.float32)
    loss = jax.block_until_ready(atloc_criterion(pred, targ, sax, saq))
    ref = jax.block_until_ready(atloc_criterion_ref(pred, targ, sax, saq))
    assert jnp.allclose(loss, ref, rtol=1e-6, atol=1e-6), (loss, ref)

    # --- Test 2: non-zero betas (exercises the exp/beta terms). ---
    loss_b = jax.block_until_ready(
        atloc_criterion(pred, targ, jnp.float32(0.5), jnp.float32(-1.5)))
    ref_b = jax.block_until_ready(
        atloc_criterion_ref(pred, targ, jnp.float32(0.5), jnp.float32(-1.5)))
    assert jnp.allclose(loss_b, ref_b, rtol=1e-6, atol=1e-6), (loss_b, ref_b)

    # --- Test 3: multi-block grid with ragged (masked) last block + pad path. ---
    kp, kt, key = jax.random.split(key, 3)
    pred2 = jax.random.normal(kp, (1100, D), dtype=jnp.float32)
    targ2 = jax.random.normal(kt, (1100, D), dtype=jnp.float32)
    loss2 = jax.block_until_ready(
        atloc_criterion(pred2, targ2, sax, saq, max_tile_rows=48))  # grid=(2,)
    ref2 = jax.block_until_ready(atloc_criterion_ref(pred2, targ2, sax, saq))
    assert jnp.allclose(loss2, ref2, rtol=1e-5, atol=1e-5), (loss2, ref2)

    # --- Test 4: zero-copy path (B*D % 128 == 0), multi-block, no tail. ---
    kp, kt, key = jax.random.split(key, 3)
    pred3 = jax.random.normal(kp, (2048, D), dtype=jnp.float32)
    targ3 = jax.random.normal(kt, (2048, D), dtype=jnp.float32)
    loss3 = jax.block_until_ready(
        atloc_criterion(pred3, targ3, sax, saq, max_tile_rows=48))
    ref3 = jax.block_until_ready(atloc_criterion_ref(pred3, targ3, sax, saq))
    assert jnp.allclose(loss3, ref3, rtol=1e-5, atol=1e-5), (loss3, ref3)

    # --- Test 5: bf16 inputs, default tile (kernel upcasts on the VPU). ---
    pred_bf = pred3.astype(jnp.bfloat16)
    targ_bf = targ3.astype(jnp.bfloat16)
    loss4 = jax.block_until_ready(atloc_criterion(pred_bf, targ_bf, sax, saq))
    ref4 = jax.block_until_ready(atloc_criterion_ref(pred_bf, targ_bf, sax, saq))
    assert jnp.allclose(loss4, ref4, rtol=1e-5, atol=1e-5), (loss4, ref4)

    print("KERNEL_OK")
</pallas_src>

<mosaic_0001>
module attributes {stable_mosaic.version = 11 : i64} {
  func.func @_atloc_kernel(%arg0: i32, %arg1: memref<1x1xf32, #tpu.memory_space<vmem>>, %arg2: memref<1x1xf32, #tpu.memory_space<vmem>>, %arg3: memref<48x128xf32, #tpu.memory_space<vmem>>, %arg4: memref<48x128xf32, #tpu.memory_space<vmem>>, %arg5: memref<1x1xf32, #tpu.memory_space<vmem>>, %arg6: memref<48x128xf32, #tpu.memory_space<vmem>>) attributes {dimension_semantics = [#tpu.dimension_semantics<arbitrary>], iteration_bounds = array<i64: 1>, scalar_prefetch = 0 : i64, scratch_operands = 1 : i64, tpu.core_type = #tpu.core_type<tc>, window_params = [{pipeline_mode = #tpu.pipeline_mode<synchronous>, transform_indices = @transform_0, window_bounds = array<i64: 1, 1>}, {pipeline_mode = #tpu.pipeline_mode<synchronous>, transform_indices = @transform_1, window_bounds = array<i64: 1, 1>}, {transform_indices = @transform_2, window_bounds = array<i64: 48, 128>}, {transform_indices = @transform_3, window_bounds = array<i64: 48, 128>}, {pipeline_mode = #tpu.pipeline_mode<synchronous>, transform_indices = @transform_4, window_bounds = array<i64: 1, 1>}]} {
    %c0_i32 = arith.constant 0 : i32
    %0 = arith.cmpi eq, %arg0, %c0_i32 : i32
    %1 = arith.extui %0 : i1 to i32
    %c0_i32_0 = arith.constant 0 : i32
    %2 = arith.cmpi ne, %1, %c0_i32_0 : i32
    scf.if %2 {
      %cst_9 = arith.constant 0.000000e+00 : f32
      %19 = vector.broadcast %cst_9 : f32 to vector<48x128xf32>
      %c0_10 = arith.constant 0 : index
      %c0_11 = arith.constant 0 : index
      %20 = vector.load %arg6[%c0_10, %c0_11] : memref<48x128xf32, #tpu.memory_space<vmem>>, vector<48x128xf32>
      tpu.vector_store %arg6[%c0_10, %c0_11], %19 {strides = array<i32>} : memref<48x128xf32, #tpu.memory_space<vmem>>, vector<48x128xf32>,
    } else {
    }
    %c0 = arith.constant 0 : index
    %c0_1 = arith.constant 0 : index
    %3 = vector.load %arg6[%c0, %c0_1] : memref<48x128xf32, #tpu.memory_space<vmem>>, vector<48x128xf32>
    %cst = arith.constant 0.000000e+00 : f32
    %4 = vector.broadcast %cst : f32 to vector<48x128xf32>
    %c0_i32_2 = arith.constant 0 : i32
    %c48_i32 = arith.constant 48 : i32
    %5 = arith.muli %c0_i32_2, %c48_i32 : i32
    %6 = tpu.assume_multiple %5, 48 : i32
    %7 = arith.index_cast %6 : i32 to index
    %c0_3 = arith.constant 0 : index
    %8 = vector.load %arg3[%7, %c0_3] : memref<48x128xf32, #tpu.memory_space<vmem>>, vector<48x128xf32>
    %9 = arith.index_cast %6 : i32 to index
    %c0_4 = arith.constant 0 : index
    %10 = vector.load %arg4[%9, %c0_4] : memref<48x128xf32, #tpu.memory_space<vmem>>, vector<48x128xf32>
    %11 = arith.subf %8, %10 : vector<48x128xf32>
    %12 = math.absf %11 : vector<48x128xf32>
    %13 = arith.addf %4, %12 : vector<48x128xf32>
    %c1_i32 = arith.constant 1 : i32
    %14 = arith.addf %3, %13 : vector<48x128xf32>
    %c0_5 = arith.constant 0 : index
    %c0_6 = arith.constant 0 : index
    %15 = vector.load %arg6[%c0_5, %c0_6] : memref<48x128xf32, #tpu.memory_space<vmem>>, vector<48x128xf32>
    tpu.vector_store %arg6[%c0_5, %c0_6], %14 {strides = array<i32>} : memref<48x128xf32, #tpu.memory_space<vmem>>, vector<48x128xf32>,
    %c0_i32_7 = arith.constant 0 : i32
    %16 = arith.cmpi eq, %arg0, %c0_i32_7 : i32
    %17 = arith.extui %16 : i1 to i32
    %c0_i32_8 = arith.constant 0 : i32
    %18 = arith.cmpi ne, %17, %c0_i32_8 : i32
    scf.if %18 {
      %c0_9 = arith.constant 0 : index
      %c0_10 = arith.constant 0 : index
      %19 = vector.load %arg6[%c0_9, %c0_10] : memref<48x128xf32, #tpu.memory_space<vmem>>, vector<48x128xf32>
      %20 = tpu.iota {dimensions = array<i32: 0>} : vector<48x128xi32>
      %21 = tpu.iota {dimensions = array<i32: 1>} : vector<48x128xi32>
      %c128_i32 = arith.constant 128 : i32
      %22 = vector.broadcast %c128_i32 : i32 to vector<48x128xi32>
      %23 = arith.muli %20, %22 : vector<48x128xi32>
      %24 = arith.addi %23, %21 : vector<48x128xi32>
      %25 = arith.sitofp %24 : vector<48x128xi32> to vector<48x128xf32>
      %cst_11 = arith.constant 6.000000e+00 : f32
      %26 = vector.broadcast %cst_11 : f32 to vector<48x128xf32>
      %27 = arith.divf %25, %26 : vector<48x128xf32>
      %28 = math.floor %27 : vector<48x128xf32>
      %cst_12 = arith.constant 6.000000e+00 : f32
      %29 = vector.broadcast %cst_12 : f32 to vector<48x128xf32>
      %30 = arith.mulf %29, %28 : vector<48x128xf32>
      %31 = arith.subf %25, %30 : vector<48x128xf32>
      %cst_13 = arith.constant 3.000000e+00 : f32
      %32 = vector.broadcast %cst_13 : f32 to vector<48x128xf32>
      %33 = arith.cmpf olt, %31, %32 : vector<48x128xf32>
      %cst_14 = arith.constant 0.000000e+00 : f32
      %34 = vector.broadcast %cst_14 : f32 to vector<48x128xf32>
      %35 = arith.select %33, %19, %34 : vector<48x128xi1>, vector<48x128xf32>
      %36 = vector.shape_cast %35 : vector<48x128xf32> to vector<1x48x128xf32>
      %cst_15 = arith.constant dense<0.000000e+00> : vector<1xf32>
      %37 = vector.multi_reduction <add>, %36, %cst_15 [1, 2] : vector<1x48x128xf32> to vector<1xf32>
      %38 = vector.shape_cast %37 : vector<1xf32> to vector<1x1x1xf32>
      %39 = vector.extract %38[0, 0, 0] : f32 from vector<1x1x1xf32>
      %cst_16 = arith.constant 0.000000e+00 : f32
      %40 = vector.broadcast %cst_16 : f32 to vector<48x128xf32>
      %41 = arith.select %33, %40, %19 : vector<48x128xi1>, vector<48x128xf32>
      %42 = vector.shape_cast %41 : vector<48x128xf32> to vector<1x48x128xf32>
      %cst_17 = arith.constant dense<0.000000e+00> : vector<1xf32>
      %43 = vector.multi_reduction <add>, %42, %cst_17 [1, 2] : vector<1x48x128xf32> to vector<1xf32>
      %44 = vector.shape_cast %43 : vector<1xf32> to vector<1x1x1xf32>
      %45 = vector.extract %44[0, 0, 0] : f32 from vector<1x1x1xf32>
      %cst_18 = arith.constant 2.400000e+01 : f32
      %46 = arith.divf %39, %cst_18 : f32
      %cst_19 = arith.constant 2.400000e+01 : f32
      %47 = arith.divf %45, %cst_19 : f32
      %c0_20 = arith.constant 0 : index
      %c0_21 = arith.constant 0 : index
      %48 = vector.load %arg1[%c0_20, %c0_21] : memref<1x1xf32, #tpu.memory_space<vmem>>, vector<1x1xf32>
      %c0_22 = arith.constant 0 : index
      %c0_23 = arith.constant 0 : index
      %49 = vector.load %arg2[%c0_22, %c0_23] : memref<1x1xf32, #tpu.memory_space<vmem>>, vector<1x1xf32>
      %cst_24 = arith.constant 0.000000e+00 : f32
      %50 = vector.broadcast %cst_24 : f32 to vector<1x1xf32>
      %51 = arith.subf %50, %48 : vector<1x1xf32>
      %52 = math.exp %51 : vector<1x1xf32>
      %53 = vector.broadcast %46 : f32 to vector<1x1xf32>
      %54 = arith.mulf %52, %53 : vector<1x1xf32>
      %55 = arith.addf %54, %48 : vector<1x1xf32>
      %cst_25 = arith.constant 0.000000e+00 : f32
      %56 = vector.broadcast %cst_25 : f32 to vector<1x1xf32>
      %57 = arith.subf %56, %49 : vector<1x1xf32>
      %58 = math.exp %57 : vector<1x1xf32>
      %59 = vector.broadcast %47 : f32 to vector<1x1xf32>
      %60 = arith.mulf %58, %59 : vector<1x1xf32>
      %61 = arith.addf %55, %60 : vector<1x1xf32>
      %62 = arith.addf %61, %49 : vector<1x1xf32>
      %c0_26 = arith.constant 0 : index
      %c0_27 = arith.constant 0 : index
      %63 = vector.load %arg5[%c0_26, %c0_27] : memref<1x1xf32, #tpu.memory_space<vmem>>, vector<1x1xf32>
      tpu.vector_store %arg5[%c0_26, %c0_27], %62 {strides = array<i32>} : memref<1x1xf32, #tpu.memory_space<vmem>>, vector<1x1xf32>,
    } else {
    }
    return
  }
  func.func @transform_0(%arg0: i32) -> (i32, i32) {
    %c0_i32 = arith.constant 0 : i32
    %c0_i32_0 = arith.constant 0 : i32
    %c0_i32_1 = arith.constant 0 : i32
    return %c0_i32, %c0_i32_0 : i32, i32
  }
  func.func @transform_1(%arg0: i32) -> (i32, i32) {
    %c0_i32 = arith.constant 0 : i32
    %c0_i32_0 = arith.constant 0 : i32
    %c0_i32_1 = arith.constant 0 : i32
    return %c0_i32, %c0_i32_0 : i32, i32
  }
  func.func @transform_2(%arg0: i32) -> (i32, i32) {
    %c0_i32 = arith.constant 0 : i32
    %c0_i32_0 = arith.constant 0 : i32
    return %arg0, %c0_i32 : i32, i32
  }
  func.func @transform_3(%arg0: i32) -> (i32, i32) {
    %c0_i32 = arith.constant 0 : i32
    %c0_i32_0 = arith.constant 0 : i32
    return %arg0, %c0_i32 : i32, i32
  }
  func.func @transform_4(%arg0: i32) -> (i32, i32) {
    %c0_i32 = arith.constant 0 : i32
    %c0_i32_0 = arith.constant 0 : i32
    %c0_i32_1 = arith.constant 0 : i32
    return %c0_i32, %c0_i32_0 : i32, i32
  }
}

</mosaic_0001>

<llo_original>
// kernel: tpu_custom_call.1
$region0: #{tpu_custom_call.1}
  #allocation0 [shape = 'u32[]', space=smem, size = 0x4, offset = 0x4, fixed_abs, tag = 'smem constant byte address 0x4 - core index']
  #allocation1 [shape = 'u32[144,128]{1,0:T(1,128)}', space=vmem, size = 0x12000, scoped, tag = 'internal scratch']
  #allocation2 [shape = 'f32[48,128]{1,0:T(8,128)}', space=vmem, size = 0x6000, scoped, tag = 'scratch operand']
  #allocation3 [shape = 'f32[1,1]{1,0:T(1,128)S(1)}', space=vmem, size = 0x200, scoped, tag = 'scoped memory for tpu_custom_call.1']
  #allocation4 [shape = 'f32[1,1]{1,0:T(1,128)S(1)}', space=vmem, size = 0x200, scoped, tag = 'scoped memory for tpu_custom_call.1']
  %s0 = inlined_call_operand.<no memory space> [shape: f32[1,1], index: 0, kind: input, shape index: {}]
  %s1 = inlined_call_operand.<no memory space> [shape: f32[1,1], index: 1, kind: input, shape index: {}]
  %s2 = inlined_call_operand.hbm [shape: f32[48,128], index: 2, kind: input, shape index: {}]
  %s3 = inlined_call_operand.hbm [shape: f32[48,128], index: 3, kind: input, shape index: {}]
  %s4 = inlined_call_operand.hbm [shape: f32[1,1], index: 4, kind: output, shape index: {}]
  %s5 = sld [smem:[#allocation0]]
  $region42: #{tpu_custom_call.1} parent=0
    _
  %s7 = ssub.s32 1, %s5
  %s8 = scalar_select 0, %s7, %s5
  %v9 = vstv %s0
  %10 = vst [vmem:[#allocation3] sm:$0x1] %v9
  %v11 = vstv %s1
  %12 = vst [vmem:[#allocation4] sm:$0x1] %v11
  $region1: #{tpu_custom_call.1} parent=0
    #allocation5 [shape = 'u8[24576]{0}', space=vmem, size = 0x6000, scoped, tag = 'input window, operand 2, single buffered']
    #allocation6 [shape = 's32[1]{0}', space=sflag, size = 0x4, scoped, tag = 'scoped memory for tpu_custom_call.1']
    #allocation7 [shape = 's32[1]{0}', space=sflag, size = 0x4, scoped, tag = 'scoped memory for tpu_custom_call.1']
    #allocation8 [shape = 'u8[24576]{0}', space=vmem, size = 0x6000, scoped, tag = 'input window, operand 3, single buffered']
    #allocation9 [shape = 's32[1]{0}', space=sflag, size = 0x4, scoped, tag = 'scoped memory for tpu_custom_call.1']
    #allocation10 [shape = 'u8[512]{0}', space=vmem, size = 0x400, scoped, tag = 'output window, operand 0, single buffered']
    %13 = vsyncpa [#allocation6], 0
    %14 = vsyncpa [#allocation9], 0
    %15 = vsyncpa [#allocation7], 0
    // Predicated region
    $region2: #{tpu_custom_call.1} parent=1 // pred_check
      _
    $region3: #{tpu_custom_call.1} parent=1 // pred_check_branch
      %17 = sbr.rel (0) target = $region5
    $region4: #{tpu_custom_call.1} parent=1 // pred_region
      _
    $region5: #{tpu_custom_call.1} parent=1 // pred_fallthru
      _
    // Predicated region
    $region6: #{tpu_custom_call.1} parent=1 // pred_check
      _
    $region7: #{tpu_custom_call.1} parent=1 // pred_check_branch
      %19 = sbr.rel (0) target = $region9
    $region8: #{tpu_custom_call.1} parent=1 // pred_region
      _
    $region9: #{tpu_custom_call.1} parent=1 // pred_fallthru
      _
    // Predicated region
    $region10: #{tpu_custom_call.1} parent=1 // pred_check
      _
    $region11: #{tpu_custom_call.1} parent=1 // pred_check_branch
      %21 = sbr.rel (0) target = $region13
    $region12: #{tpu_custom_call.1} parent=1 // pred_region
      %s23 = ssub.s32 768, 768
      %24 = vsyncadd [#allocation6], %s23
      %s25 = sshll.u32 [#allocation5], 4
      %s26 = int_to_ptr.vmem [resolvable:$true] %s25
      %31 = dma.hbm_to_vmem [thread:$0]  %s2, 768, %s26, [#allocation6], 128, 128, 8
    $region13: #{tpu_custom_call.1} parent=1 // pred_fallthru
      _
    // Predicated region
    $region14: #{tpu_custom_call.1} parent=1 // pred_check
      _
    $region15: #{tpu_custom_call.1} parent=1 // pred_check_branch
      %33 = sbr.rel (0) target = $region17
    $region16: #{tpu_custom_call.1} parent=1 // pred_region
      %s35 = ssub.s32 768, 768
      %36 = vsyncadd [#allocation9], %s35
      %s37 = sshll.u32 [#allocation8], 4
      %s38 = int_to_ptr.vmem [resolvable:$true] %s37
      %43 = dma.hbm_to_vmem [thread:$0]  %s3, 768, %s38, [#allocation9], 128, 128, 8
    $region17: #{tpu_custom_call.1} parent=1 // pred_fallthru
      _
    // Predicated region
    $region18: #{tpu_custom_call.1} parent=1 // pred_check
      _
    $region19: #{tpu_custom_call.1} parent=1 // pred_check_branch
      %45 = sbr.rel (0) target = $region21
    $region20: #{tpu_custom_call.1} parent=1 // pred_region
      %46 = dma.done [#allocation6], 768
    $region21: #{tpu_custom_call.1} parent=1 // pred_fallthru
      _
    // Predicated region
    $region22: #{tpu_custom_call.1} parent=1 // pred_check
      _
    $region23: #{tpu_custom_call.1} parent=1 // pred_check_branch
      %48 = sbr.rel (0) target = $region25
    $region24: #{tpu_custom_call.1} parent=1 // pred_region
      %49 = dma.done [#allocation9], 768
    $region25: #{tpu_custom_call.1} parent=1 // pred_fallthru
      _
    %p50 = scmp.eq.s32.totalorder 0, 0
    // Predicated region
    $region26: #{tpu_custom_call.1} parent=1 // pred_check
      %p51 = pneg %p50
    $region27: #{tpu_custom_call.1} parent=1 // pred_check_branch
      %53 = sbr.rel (%p51) target = $region29
    $region28: #{tpu_custom_call.1} parent=1 // pred_region
      %54 = vst [vmem:[#allocation2] sm:$0xff] 0.0
      %55 = vst [vmem:[#allocation2 + $0x8] sm:$0xff] 0.0
      %56 = vst [vmem:[#allocation2 + $0x10] sm:$0xff] 0.0
      %57 = vst [vmem:[#allocation2 + $0x18] sm:$0xff] 0.0
      %58 = vst [vmem:[#allocation2 + $0x20] sm:$0xff] 0.0
      %59 = vst [vmem:[#allocation2 + $0x28] sm:$0xff] 0.0
    $region29: #{tpu_custom_call.1} parent=1 // pred_fallthru
      _
    %v60 = vld [vmem:[#allocation2] sm:$0xff]
    %v61 = vld [vmem:[#allocation2 + $0x8] sm:$0xff]
    %v62 = vld [vmem:[#allocation2 + $0x10] sm:$0xff]
    %v63 = vld [vmem:[#allocation2 + $0x18] sm:$0xff]
    %v64 = vld [vmem:[#allocation2 + $0x20] sm:$0xff]
    %v65 = vld [vmem:[#allocation2 + $0x28] sm:$0xff]
    %v66 = vld [vmem:[#allocation5] sm:$0xff]
    %v67 = vld [vmem:[#allocation5 + $0x8] sm:$0xff]
    %v68 = vld [vmem:[#allocation5 + $0x10] sm:$0xff]
    %v69 = vld [vmem:[#allocation5 + $0x18] sm:$0xff]
    %v70 = vld [vmem:[#allocation5 + $0x20] sm:$0xff]
    %v71 = vld [vmem:[#allocation5 + $0x28] sm:$0xff]
    %v72 = vld [vmem:[#allocation8] sm:$0xff]
    %v73 = vld [vmem:[#allocation8 + $0x8] sm:$0xff]
    %v74 = vld [vmem:[#allocation8 + $0x10] sm:$0xff]
    %v75 = vld [vmem:[#allocation8 + $0x18] sm:$0xff]
    %v76 = vld [vmem:[#allocation8 + $0x20] sm:$0xff]
    %v77 = vld [vmem:[#allocation8 + $0x28] sm:$0xff]
    %v78 = vsub.f32 %v66, %v72
    %v79 = vsub.f32 %v67, %v73
    %v80 = vsub.f32 %v68, %v74
    %v81 = vsub.f32 %v69, %v75
    %v82 = vsub.f32 %v70, %v76
    %v83 = vsub.f32 %v71, %v77
    %v84 = vand.u32 2147483647, %v78
    %v85 = vand.u32 2147483647, %v79
    %v86 = vand.u32 2147483647, %v80
    %v87 = vand.u32 2147483647, %v81
    %v88 = vand.u32 2147483647, %v82
    %v89 = vand.u32 2147483647, %v83
    %v90 = vadd.f32 %v84, 0.0
    %v91 = vadd.f32 %v85, 0.0
    %v92 = vadd.f32 %v86, 0.0
    %v93 = vadd.f32 %v87, 0.0
    %v94 = vadd.f32 %v88, 0.0
    %v95 = vadd.f32 %v89, 0.0
    %v96 = vadd.f32 %v60, %v90
    %v97 = vadd.f32 %v61, %v91
    %v98 = vadd.f32 %v62, %v92
    %v99 = vadd.f32 %v63, %v93
    %v100 = vadd.f32 %v64, %v94
    %v101 = vadd.f32 %v65, %v95
    %102 = vst [vmem:[#allocation2] sm:$0xff] %v96
    %103 = vst [vmem:[#allocation2 + $0x8] sm:$0xff] %v97
    %104 = vst [vmem:[#allocation2 + $0x10] sm:$0xff] %v98
    %105 = vst [vmem:[#allocation2 + $0x18] sm:$0xff] %v99
    %106 = vst [vmem:[#allocation2 + $0x20] sm:$0xff] %v100
    %107 = vst [vmem:[#allocation2 + $0x28] sm:$0xff] %v101
    // Predicated region
    $region30: #{tpu_custom_call.1} parent=1 // pred_check
      %p108 = pneg %p50
    $region31: #{tpu_custom_call.1} parent=1 // pred_check_branch
      %110 = sbr.rel (%p108) target = $region33
    $region32: #{tpu_custom_call.1} parent=1 // pred_region
      %v111 = vld [vmem:[#allocation2] sm:$0xff]
      %v112 = vld [vmem:[#allocation2 + $0x8] sm:$0xff]
      %v113 = vld [vmem:[#allocation2 + $0x10] sm:$0xff]
      %v114 = vld [vmem:[#allocation2 + $0x18] sm:$0xff]
      %v115 = vld [vmem:[#allocation2 + $0x20] sm:$0xff]
      %v116 = vld [vmem:[#allocation2 + $0x28] sm:$0xff]
      %v117 = vlaneseq
      %v118 = vshrl.u32 %v117, 7
      %v119 = vadd.s32 %v118, 8
      %v120 = vadd.s32 %v118, 16
      %v121 = vadd.s32 %v118, 24
      %v122 = vadd.s32 %v118, 32
      %v123 = vadd.s32 %v118, 40
      %v124 = vlaneseq
      %v125 = vand.u32 %v124, 127
      %v126 = vmul.u32 %v118, 128
      %v127 = vmul.u32 %v119, 128
      %v128 = vmul.u32 %v120, 128
      %v129 = vmul.u32 %v121, 128
      %v130 = vmul.u32 %v122, 128
      %v131 = vmul.u32 %v123, 128
      %v132 = vadd.s32 %v126, %v125
      %v133 = vadd.s32 %v127, %v125
      %v134 = vadd.s32 %v128, %v125
      %v135 = vadd.s32 %v129, %v125
      %v136 = vadd.s32 %v130, %v125
      %v137 = vadd.s32 %v131, %v125
      %v138 = vcvt.s32.f32 %v132
      %v139 = vcvt.s32.f32 %v133
      %v140 = vcvt.s32.f32 %v134
      %v141 = vcvt.s32.f32 %v135
      %v142 = vcvt.s32.f32 %v136
      %v143 = vcvt.s32.f32 %v137
      %v144 = vrcp.pop 6.0
      %v145 = vmul.f32 %v138, %v144
      %v146 = vmul.f32 %v139, %v144
      %v147 = vmul.f32 %v140, %v144
      %v148 = vmul.f32 %v141, %v144
      %v149 = vmul.f32 %v142, %v144
      %v150 = vmul.f32 %v143, %v144
      %v151 = vfloor.f32 %v145
      %v152 = vfloor.f32 %v146
      %v153 = vfloor.f32 %v147
      %v154 = vfloor.f32 %v148
      %v155 = vfloor.f32 %v149
      %v156 = vfloor.f32 %v150
      %v157 = vmul.f32 %v151, 6.0
      %v158 = vmul.f32 %v152, 6.0
      %v159 = vmul.f32 %v153, 6.0
      %v160 = vmul.f32 %v154, 6.0
      %v161 = vmul.f32 %v155, 6.0
      %v162 = vmul.f32 %v156, 6.0
      %v163 = vsub.f32 %v138, %v157
      %v164 = vsub.f32 %v139, %v158
      %v165 = vsub.f32 %v140, %v159
      %v166 = vsub.f32 %v141, %v160
      %v167 = vsub.f32 %v142, %v161
      %v168 = vsub.f32 %v143, %v162
      %vm169 = vcmp.lt.f32.partialorder %v163, 3.0
      %vm170 = vcmp.lt.f32.partialorder %v164, 3.0
      %vm171 = vcmp.lt.f32.partialorder %v165, 3.0
      %vm172 = vcmp.lt.f32.partialorder %v166, 3.0
      %vm173 = vcmp.lt.f32.partialorder %v167, 3.0
      %vm174 = vcmp.lt.f32.partialorder %v168, 3.0
      %v175 = vsel %vm169, %v111, 0.0
      %v176 = vsel %vm170, %v112, 0.0
      %v177 = vsel %vm171, %v113, 0.0
      %v178 = vsel %vm172, %v114, 0.0
      %v179 = vsel %vm173, %v115, 0.0
      %v180 = vsel %vm174, %v116, 0.0
      %v181 = vadd.f32 %v175, %v176
      %v182 = vadd.f32 %v181, %v177
      %v183 = vadd.f32 %v182, %v178
      %v184 = vadd.f32 %v183, %v179
      %v185 = vadd.f32 %v184, %v180
      %186 = vadd.xlane.f32.xlu0 %v185
      %v187 = vpop.xlane.xlu0 %186
      %v188 = vrot.slane %v187, 4
      %v189 = vadd.f32 %v187, %v188
      %v190 = vrot.slane %v189, 2
      %v191 = vadd.f32 %v189, %v190
      %v192 = vrot.slane %v191, 1
      %v193 = vadd.f32 %v191, %v192
      %s194 = vtos %v193
      %v195 = vsel %vm169, 0.0, %v111
      %v196 = vsel %vm170, 0.0, %v112
      %v197 = vsel %vm171, 0.0, %v113
      %v198 = vsel %vm172, 0.0, %v114
      %v199 = vsel %vm173, 0.0, %v115
      %v200 = vsel %vm174, 0.0, %v116
      %v201 = vadd.f32 %v195, %v196
      %v202 = vadd.f32 %v201, %v197
      %v203 = vadd.f32 %v202, %v198
      %v204 = vadd.f32 %v203, %v199
      %v205 = vadd.f32 %v204, %v200
      %206 = vadd.xlane.f32.xlu0 %v205
      %v207 = vpop.xlane.xlu0 %206
      %v208 = vrot.slane %v207, 4
      %v209 = vadd.f32 %v207, %v208
      %v210 = vrot.slane %v209, 2
      %v211 = vadd.f32 %v209, %v210
      %v212 = vrot.slane %v211, 1
      %v213 = vadd.f32 %v211, %v212
      %s214 = vtos %v213
      %v215 = vrcp.pop 24.0
      %s216 = vtos %v215
      %s217 = smul.f32 %s194, %s216
      %v218 = vrcp.pop 24.0
      %s219 = vtos %v218
      %s220 = smul.f32 %s214, %s219
      %v221 = vld [vmem:[#allocation3] sm:$0x1]
      %v222 = vld [vmem:[#allocation4] sm:$0x1]
      %v223 = vsub.f32 0.0, %v221
      %v224 = vmul.f32 %v223, 1.442695
      %v225 = vpow.pop %v224
      %v226 = vstv %s217
      %v227 = vmul.f32 %v225, %v226
      %v228 = vadd.f32 %v227, %v221
      %v229 = vsub.f32 0.0, %v222
      %v230 = vmul.f32 %v229, 1.442695
      %v231 = vpow.pop %v230
      %v232 = vstv %s220
      %v233 = vmul.f32 %v231, %v232
      %v234 = vadd.f32 %v228, %v233
      %v235 = vadd.f32 %v234, %v222
      %vm236 = vcmask 0
      %237 = vst.msk [vmem:[#allocation10] sm:$0x1] %vm236, %v235
    $region33: #{tpu_custom_call.1} parent=1 // pred_fallthru
      _
    // Predicated region
    $region34: #{tpu_custom_call.1} parent=1 // pred_check
      _
    $region35: #{tpu_custom_call.1} parent=1 // pred_check_branch
      %239 = sbr.rel (0) target = $region37
    $region36: #{tpu_custom_call.1} parent=1 // pred_region
      %s241 = ssub.s32 16, 16
      %242 = vsyncadd [#allocation7], %s241
      %s244 = sshll.u32 [#allocation10], 4
      %s245 = int_to_ptr.vmem [resolvable:$true] %s244
      %247 = dma.vmem_to_hbm [thread:$0]  %s245, 16, %s4, [#allocation7]
    $region37: #{tpu_custom_call.1} parent=1 // pred_fallthru
      _
    // Predicated region
    $region38: #{tpu_custom_call.1} parent=1 // pred_check
      _
    $region39: #{tpu_custom_call.1} parent=1 // pred_check_branch
      %249 = sbr.rel (0) target = $region41
    $region40: #{tpu_custom_call.1} parent=1 // pred_region
      %250 = dma.done [#allocation7], 16
    $region41: #{tpu_custom_call.1} parent=1 // pred_fallthru
      _
    %251 = vsyncpa [#allocation6], 1
    %252 = vsyncpa [#allocation9], 1
    %253 = vsyncpa [#allocation7], 1

</llo_original>
